<compile_context>
chip_gen: v7x
topology: tpu7x:2x2x1
jax: 0.10.0
libtpu: 0.0.40
codegen_flags: <defaults>
</compile_context>

<pallas_src>
import jax
import jax.numpy as jnp
from jax import lax
from jax.experimental import pallas as pl
from jax.experimental.pallas import tpu as pltpu


# ----------------------------- tiling helpers ------------------------------ #

# Per data-block budget (bytes). 2 MiB f32 blocks already saturate ~85% of the
# HBM roofline; the double-buffered x+y footprint (~8 MiB) fits v5e's 16 MiB
# default scoped VMEM and sits far below v7x's 64 MiB physical VMEM.
_BLOCK_BUDGET_BYTES = 2 << 20


def _round_up(x: int, m: int) -> int:
    return ((x + m - 1) // m) * m


def _pick_tile(dim: int, target: int, align: int) -> int:
    """Block size for ragged (cdiv) tiling: the full dim if it is at most one
    alignment unit, otherwise a multiple of `align` no larger than `target`
    and no larger than needed to cover `dim`."""
    if dim <= align:
        return dim
    return min(_round_up(dim, align), max(align, (target // align) * align))


def _split_for_megacore(dim: int, tile: int, align: int) -> int:
    """If a 'parallel' axis would get a single block, shrink the tile so it
    gets two (lets v7x megacore shard the grid; the ~0.35us extra step is
    noise at these block sizes and harmless on single-TC v5e/v6e)."""
    if dim <= align or pl.cdiv(dim, tile) >= 2:
        return tile
    return max(align, _round_up(pl.cdiv(dim, 2), align))


def _vmem_limit(data_bytes: int) -> int:
    """Explicit scoped-VMEM limit: actual pipelined footprint plus margin,
    clamped to [16 MiB, 64 MiB] so it is valid on every TPU generation."""
    return int(min(64 << 20, max(16 << 20, data_bytes + (4 << 20))))


# ----------------------------- kernels ------------------------------------ #

def make_actnorm_init_apply_kernel(direct: bool):
    """Fused first-call kernel (full batch resident per feature tile):
    per-feature mean / unbiased std over the batch axis, write weight & bias,
    and apply the normalization — one pass over x.

    The two-pass (mean, then squared deviations) form is kept on purpose: the
    data is already resident, it is numerically safer than E[x^2]-E[x]^2, and
    the kernel is HBM-bound either way."""

    def kernel(x_ref, w_ref, b_ref, y_ref):
        x = x_ref[...].astype(jnp.float32)                    # (B, td)
        n = x.shape[0]
        mean = jnp.mean(x, axis=0, keepdims=True)             # (1, td)
        # unbiased (ddof=1), matching torch.std; B=1 yields NaN exactly like torch.
        var = jnp.sum((x - mean) ** 2, axis=0, keepdims=True) / (n - 1)
        w = jnp.log(1.0 / (jnp.sqrt(var) + 1e-12))
        w_ref[...] = w
        b_ref[...] = mean
        if direct:
            y_ref[...] = ((x - mean) * jnp.exp(w)).astype(y_ref.dtype)
        else:
            y_ref[...] = (x * jnp.exp(-w) + mean).astype(y_ref.dtype)

    return kernel


def make_actnorm_stats_kernel(batch: int):
    """Streaming first-call statistics for large batches.

    Grid: (feature tiles ['parallel'], batch tiles ['arbitrary']). Shifted sum
    and sum-of-squares accumulate in VMEM scratch; weight/bias are finalized on
    the last batch step via pl.when. Padded (out-of-range) batch rows of the
    trailing tile are masked out with a broadcasted iota."""

    def kernel(x_ref, w_ref, b_ref, shift_ref, s1_ref, s2_ref):
        bstep = pl.program_id(1)
        tb, td = x_ref.shape
        x = x_ref[...].astype(jnp.float32)

        @pl.when(bstep == 0)
        def _():
            # shift by the first batch row (per feature): numerically stable
            # one-pass sum / sum-of-squares (no E[x^2]-E[x]^2 cancellation).
            shift_ref[...] = x[0:1, :]
            s1_ref[...] = jnp.zeros_like(s1_ref)
            s2_ref[...] = jnp.zeros_like(s2_ref)

        row = bstep * tb + lax.broadcasted_iota(jnp.int32, (tb, td), 0)
        d = jnp.where(row < batch, x - shift_ref[...], 0.0)
        s1_ref[...] += jnp.sum(d, axis=0, keepdims=True)
        s2_ref[...] += jnp.sum(d * d, axis=0, keepdims=True)

        @pl.when(bstep == pl.num_programs(1) - 1)
        def _():
            s1 = s1_ref[...]
            var = (s2_ref[...] - s1 * s1 * (1.0 / batch)) * (1.0 / (batch - 1))
            var = jnp.maximum(var, 0.0)            # guard tiny negative rounding
            w_ref[...] = jnp.log(1.0 / (jnp.sqrt(var) + 1e-12))
            b_ref[...] = shift_ref[...] + s1 * (1.0 / batch)

    return kernel


def make_actnorm_apply_kernel(direct: bool):
    """Already-initialized path: pure elementwise affine transform."""

    def kernel(x_ref, w_ref, b_ref, y_ref):
        w = w_ref[...]                                         # (1, td) float32
        if direct:
            y = (x_ref[...] - b_ref[...]) * jnp.exp(w)
        else:
            y = x_ref[...] * jnp.exp(-w) + b_ref[...]
        y_ref[...] = y.astype(y_ref.dtype)

    return kernel


# ----------------------------- wrappers ------------------------------------ #

def _logdet(weight, batch, direct):
    s = jnp.sum(weight.astype(jnp.float32))
    s = s if direct else -s
    return jnp.broadcast_to(s.reshape(1, 1), (batch, 1))


def _fused_feature_tile(B, D, target_td=1024):
    """Feature tile for the fused init+apply kernel (full batch resident), or
    None when the batch is too large to keep >=512-lane (or full-D) tiles
    within the per-block budget — use the streaming stats path instead."""
    d_aligned = D if D <= 128 else _round_up(D, 128)
    cap = (_BLOCK_BUDGET_BYTES // (4 * max(B, 1))) // 128 * 128
    if cap < min(512, d_aligned):
        return None
    if D <= 128:
        return D
    return min(target_td, d_aligned, cap)


def actnorm_init_apply_fused(x, mode="direct", *, td):
    """Fused data-dependent init + first apply (single pass over x).
    Returns (weight (1,D), bias (1,D), y (B,D), logdet (B,1))."""
    B, D = x.shape
    direct = (mode == "direct")
    td = _split_for_megacore(D, td, 128)
    grid = (pl.cdiv(D, td),)
    data_bytes = 2 * (2 * B * td + 2 * td) * 4        # double-buffered x, y, w, b

    w, b, y = pl.pallas_call(
        make_actnorm_init_apply_kernel(direct),
        out_shape=(jax.ShapeDtypeStruct((1, D), jnp.float32),
                   jax.ShapeDtypeStruct((1, D), jnp.float32),
                   jax.ShapeDtypeStruct((B, D), x.dtype)),
        grid=grid,
        in_specs=[pl.BlockSpec((B, td), lambda j: (0, j))],
        out_specs=(pl.BlockSpec((1, td), lambda j: (0, j)),
                   pl.BlockSpec((1, td), lambda j: (0, j)),
                   pl.BlockSpec((B, td), lambda j: (0, j))),
        compiler_params=pltpu.CompilerParams(
            dimension_semantics=("parallel",),
            vmem_limit_bytes=_vmem_limit(data_bytes)),
    )(x)
    return w, b, y, _logdet(w, B, direct)


def actnorm_init_stats(x, *, target_td=1024, target_tb=512):
    """Streaming first-call statistics for large batches.
    Returns (weight (1,D), bias (1,D))."""
    B, D = x.shape
    td = _pick_tile(D, target_td, 128)
    max_tb = max(8, (_BLOCK_BUDGET_BYTES // (4 * td)) // 8 * 8)
    tb = _pick_tile(B, min(target_tb, max_tb), 8)
    td = _split_for_megacore(D, td, 128)     # only the feature axis is parallel here
    grid = (pl.cdiv(D, td), pl.cdiv(B, tb))
    data_bytes = (2 * (tb * td + 2 * td) + 3 * td) * 4     # pipelined blocks + scratch

    w, b = pl.pallas_call(
        make_actnorm_stats_kernel(B),
        out_shape=(jax.ShapeDtypeStruct((1, D), jnp.float32),
                   jax.ShapeDtypeStruct((1, D), jnp.float32)),
        grid=grid,
        in_specs=[pl.BlockSpec((tb, td), lambda j, i: (i, j))],
        out_specs=(pl.BlockSpec((1, td), lambda j, i: (0, j)),
                   pl.BlockSpec((1, td), lambda j, i: (0, j))),
        scratch_shapes=[pltpu.VMEM((1, td), jnp.float32),
                        pltpu.VMEM((1, td), jnp.float32),
                        pltpu.VMEM((1, td), jnp.float32)],
        compiler_params=pltpu.CompilerParams(
            dimension_semantics=("parallel", "arbitrary"),
            vmem_limit_bytes=_vmem_limit(data_bytes)),
    )(x)
    return w, b


def actnorm_apply(x, weight, bias, mode="direct", *, target_tb=512, target_td=1024):
    """x: (B, D); weight/bias: (1, D). Returns (y (B, D), logdet (B, 1))."""
    B, D = x.shape
    direct = (mode == "direct")

    td = _pick_tile(D, target_td, 128)
    max_tb = max(8, (_BLOCK_BUDGET_BYTES // (4 * td)) // 8 * 8)
    tb = _pick_tile(B, min(target_tb, max_tb), 8)
    if pl.cdiv(D, td) * pl.cdiv(B, tb) < 2:        # give v7x megacore >= 2 blocks
        if B > 8:
            tb = _split_for_megacore(B, tb, 8)
        else:
            td = _split_for_megacore(D, td, 128)
    grid = (pl.cdiv(D, td), pl.cdiv(B, tb))
    data_bytes = 2 * (2 * tb * td + 2 * td) * 4    # double-buffered x, y, w, b

    y = pl.pallas_call(
        make_actnorm_apply_kernel(direct),
        out_shape=jax.ShapeDtypeStruct((B, D), x.dtype),
        grid=grid,
        # feature axis outer, batch axis inner: weight/bias block index is
        # constant across the inner sweep; both axes fully parallel.
        in_specs=[pl.BlockSpec((tb, td), lambda j, i: (i, j)),
                  pl.BlockSpec((1, td), lambda j, i: (0, j)),
                  pl.BlockSpec((1, td), lambda j, i: (0, j))],
        out_specs=pl.BlockSpec((tb, td), lambda j, i: (i, j)),
        compiler_params=pltpu.CompilerParams(
            dimension_semantics=("parallel", "parallel"),
            vmem_limit_bytes=_vmem_limit(data_bytes)),
    )(x, weight, bias)
    return y, _logdet(weight, B, direct)


class ActNorm:
    """JAX/Pallas mirror of the stateful PyTorch ActNorm module."""
    # TODO(synk): the data-dependent init mutates Python state (self.initialized,
    # self.weight/bias) like the torch module; eager use only, not jit/scan-traceable.

    def __init__(self, num_inputs):
        self.num_inputs = num_inputs
        self.weight = jnp.ones((num_inputs,), jnp.float32)   # torch.ones(num_inputs)
        self.bias = jnp.zeros((num_inputs,), jnp.float32)    # torch.zeros(num_inputs)
        self.initialized = False

    def __call__(self, inputs, cond_inputs=None, mode="direct"):
        if not self.initialized:
            B, D = inputs.shape
            td = _fused_feature_tile(B, D)
            if td is not None:
                # fused init + apply: single pass over x
                w, b, y, logdet = actnorm_init_apply_fused(inputs, mode=mode, td=td)
            else:
                # large batch: streamed stats (bounded VMEM, wide tiles), then apply
                w, b = actnorm_init_stats(inputs)
                y, logdet = actnorm_apply(inputs, w, b, mode=mode)
            self.weight = w.reshape(-1)
            self.bias = b.reshape(-1)
            self.initialized = True
            return y, logdet
        y, logdet = actnorm_apply(
            inputs,
            self.weight.reshape(1, -1),
            self.bias.reshape(1, -1),
            mode=mode,
        )
        return y, logdet


# ----------------------------- reference & main ----------------------------- #

def _reference(x, mode="direct"):
    """Pure-JAX reference of the first (initializing) forward call."""
    mean = jnp.mean(x, axis=0)
    std = jnp.std(x, axis=0, ddof=1)             # torch.std default: unbiased
    weight = jnp.log(1.0 / (std + 1e-12))
    bias = mean
    if mode == "direct":
        y = (x - bias) * jnp.exp(weight)
        ld = jnp.broadcast_to(jnp.sum(weight)[None, None], (x.shape[0], 1))
    else:
        y = x * jnp.exp(-weight) + bias
        ld = jnp.broadcast_to(-jnp.sum(weight)[None, None], (x.shape[0], 1))
    return y, ld


if __name__ == "__main__":
    key = jax.random.PRNGKey(0)
    B, D = 8, 256                                 # (batch, num_inputs)
    x = jax.random.normal(key, (B, D), dtype=jnp.float32) * 2.0 + 0.5

    layer = ActNorm(D)
    y, logdet = layer(x, mode="direct")           # first call: fused init + direct apply
    y = jax.block_until_ready(y)
    logdet = jax.block_until_ready(logdet)

    y_ref, ld_ref = _reference(x, mode="direct")
    assert y.shape == (B, D) and logdet.shape == (B, 1)
    assert jnp.allclose(y, y_ref, atol=1e-4, rtol=1e-4)
    assert jnp.allclose(logdet, ld_ref, atol=1e-4, rtol=1e-4)

    # second call path (already initialized) + inverse mode round-trip check
    x_rec, logdet_inv = layer(y, mode="inverse")
    x_rec = jax.block_until_ready(x_rec)
    assert x_rec.shape == (B, D) and logdet_inv.shape == (B, 1)
    assert jnp.allclose(x_rec, x, atol=1e-3, rtol=1e-3)
    assert jnp.allclose(logdet_inv, -ld_ref, atol=1e-4, rtol=1e-4)

    # medium shape exercising the fused init with >=2 feature blocks and the
    # tiled (feature x batch) parallel apply grid
    B2, D2 = 512, 1024
    x2 = jax.random.normal(jax.random.PRNGKey(1), (B2, D2), dtype=jnp.float32)
    layer2 = ActNorm(D2)
    y2, ld2 = layer2(x2, mode="direct")
    y2b, ld2b = layer2(x2, mode="direct")          # initialized path
    y2b = jax.block_until_ready(y2b)
    y2_ref, ld2_ref = _reference(x2, mode="direct")
    assert jnp.allclose(y2, y2_ref, atol=1e-3, rtol=1e-3)
    assert jnp.allclose(y2b, y2_ref, atol=1e-3, rtol=1e-3)
    assert jnp.allclose(ld2, ld2_ref, atol=1e-3, rtol=1e-3)

    # ragged shape exercising the streaming (batch-tiled) init path with
    # cdiv tiling + tail masking on both axes
    B3, D3 = 1544, 328
    x3 = jax.random.normal(jax.random.PRNGKey(2), (B3, D3), dtype=jnp.float32) * 1.5 - 0.3
    layer3 = ActNorm(D3)
    y3, ld3 = layer3(x3, mode="direct")
    y3 = jax.block_until_ready(y3)
    y3_ref, ld3_ref = _reference(x3, mode="direct")
    assert y3.shape == (B3, D3) and ld3.shape == (B3, 1)
    assert jnp.allclose(y3, y3_ref, atol=1e-3, rtol=1e-3)
    assert jnp.allclose(ld3, ld3_ref, atol=1e-3, rtol=1e-3)

    print("KERNEL_OK")
</pallas_src>

<mosaic_0001>
module attributes {stable_mosaic.version = 11 : i64} {
  func.func @kernel(%arg0: i32, %arg1: memref<8x128xf32, #tpu.memory_space<vmem>>, %arg2: memref<1x128xf32, #tpu.memory_space<vmem>>, %arg3: memref<1x128xf32, #tpu.memory_space<vmem>>, %arg4: memref<8x128xf32, #tpu.memory_space<vmem>>) attributes {dimension_semantics = [#tpu.dimension_semantics<parallel>], iteration_bounds = array<i64: 2>, scalar_prefetch = 0 : i64, scratch_operands = 0 : i64, tpu.core_type = #tpu.core_type<tc>, window_params = [{transform_indices = @transform_0, window_bounds = array<i64: 8, 128>}, {transform_indices = @transform_1, window_bounds = array<i64: 1, 128>}, {transform_indices = @transform_2, window_bounds = array<i64: 1, 128>}, {transform_indices = @transform_3, window_bounds = array<i64: 8, 128>}]} {
    %c0 = arith.constant 0 : index
    %c0_0 = arith.constant 0 : index
    %0 = vector.load %arg1[%c0, %c0_0] : memref<8x128xf32, #tpu.memory_space<vmem>>, vector<8x128xf32>
    %cst = arith.constant dense<0.000000e+00> : vector<128xf32>
    %1 = vector.multi_reduction <add>, %0, %cst [0] : vector<8x128xf32> to vector<128xf32>
    %2 = vector.shape_cast %1 : vector<128xf32> to vector<1x128xf32>
    %cst_1 = arith.constant 8.000000e+00 : f32
    %3 = vector.broadcast %cst_1 : f32 to vector<1x128xf32>
    %4 = arith.divf %2, %3 : vector<1x128xf32>
    %5 = vector.broadcast %4 : vector<1x128xf32> to vector<8x128xf32>
    %6 = arith.subf %0, %5 : vector<8x128xf32>
    %7 = arith.mulf %6, %6 : vector<8x128xf32>
    %cst_2 = arith.constant dense<0.000000e+00> : vector<128xf32>
    %8 = vector.multi_reduction <add>, %7, %cst_2 [0] : vector<8x128xf32> to vector<128xf32>
    %9 = vector.shape_cast %8 : vector<128xf32> to vector<1x128xf32>
    %cst_3 = arith.constant 7.000000e+00 : f32
    %10 = vector.broadcast %cst_3 : f32 to vector<1x128xf32>
    %11 = arith.divf %9, %10 : vector<1x128xf32>
    %12 = math.sqrt %11 : vector<1x128xf32>
    %cst_4 = arith.constant 9.99999996E-13 : f32
    %13 = vector.broadcast %cst_4 : f32 to vector<1x128xf32>
    %14 = arith.addf %12, %13 : vector<1x128xf32>
    %cst_5 = arith.constant 1.000000e+00 : f32
    %15 = vector.broadcast %cst_5 : f32 to vector<1x128xf32>
    %16 = arith.divf %15, %14 : vector<1x128xf32>
    %17 = math.log %16 : vector<1x128xf32>
    %c0_6 = arith.constant 0 : index
    %c0_7 = arith.constant 0 : index
    %18 = vector.load %arg2[%c0_6, %c0_7] : memref<1x128xf32, #tpu.memory_space<vmem>>, vector<1x128xf32>
    tpu.vector_store %arg2[%c0_6, %c0_7], %17 {strides = array<i32>} : memref<1x128xf32, #tpu.memory_space<vmem>>, vector<1x128xf32>,
    %c0_8 = arith.constant 0 : index
    %c0_9 = arith.constant 0 : index
    %19 = vector.load %arg3[%c0_8, %c0_9] : memref<1x128xf32, #tpu.memory_space<vmem>>, vector<1x128xf32>
    tpu.vector_store %arg3[%c0_8, %c0_9], %4 {strides = array<i32>} : memref<1x128xf32, #tpu.memory_space<vmem>>, vector<1x128xf32>,
    %20 = vector.broadcast %4 : vector<1x128xf32> to vector<8x128xf32>
    %21 = arith.subf %0, %20 : vector<8x128xf32>
    %22 = math.exp %17 : vector<1x128xf32>
    %23 = vector.broadcast %22 : vector<1x128xf32> to vector<8x128xf32>
    %24 = arith.mulf %21, %23 : vector<8x128xf32>
    %c0_10 = arith.constant 0 : index
    %c0_11 = arith.constant 0 : index
    %25 = vector.load %arg4[%c0_10, %c0_11] : memref<8x128xf32, #tpu.memory_space<vmem>>, vector<8x128xf32>
    tpu.vector_store %arg4[%c0_10, %c0_11], %24 {strides = array<i32>} : memref<8x128xf32, #tpu.memory_space<vmem>>, vector<8x128xf32>,
    return
  }
  func.func @transform_0(%arg0: i32) -> (i32, i32) {
    %c0_i32 = arith.constant 0 : i32
    %c0_i32_0 = arith.constant 0 : i32
    return %c0_i32, %arg0 : i32, i32
  }
  func.func @transform_1(%arg0: i32) -> (i32, i32) {
    %c0_i32 = arith.constant 0 : i32
    %c0_i32_0 = arith.constant 0 : i32
    return %c0_i32, %arg0 : i32, i32
  }
  func.func @transform_2(%arg0: i32) -> (i32, i32) {
    %c0_i32 = arith.constant 0 : i32
    %c0_i32_0 = arith.constant 0 : i32
    return %c0_i32, %arg0 : i32, i32
  }
  func.func @transform_3(%arg0: i32) -> (i32, i32) {
    %c0_i32 = arith.constant 0 : i32
    %c0_i32_0 = arith.constant 0 : i32
    return %c0_i32, %arg0 : i32, i32
  }
}

</mosaic_0001>

<llo_original>
// kernel: tpu_custom_call.1
$region0: #{tpu_custom_call.1}
  #allocation0 [shape = 'u32[]', space=smem, size = 0x4, offset = 0x4, fixed_abs, tag = 'smem constant byte address 0x4 - core index']
  #allocation1 [shape = 'u32[144,128]{1,0:T(1,128)}', space=vmem, size = 0x12000, scoped, tag = 'internal scratch']
  %s0 = inlined_call_operand.hbm [shape: f32[8,256], index: 0, kind: input, shape index: {}]
  %s1 = inlined_call_operand.hbm [shape: f32[1,256], index: 1, kind: output, shape index: {0}]
  %s2 = inlined_call_operand.hbm [shape: f32[1,256], index: 2, kind: output, shape index: {1}]
  %s3 = inlined_call_operand.hbm [shape: f32[8,256], index: 3, kind: output, shape index: {2}]
  %4 = xla_tuple %s1, %s2, %s3
  %s5 = sld [smem:[#allocation0]]
  $region57: #{tpu_custom_call.1} parent=0
    _
  %s7 = ssub.s32 1, %s5
  %s8 = scalar_select 0, %s7, %s5
  $region1: #{tpu_custom_call.1} parent=0
    #allocation2 [shape = 'u8[8192]{0}', space=vmem, size = 0x2000, scoped, tag = 'input window, operand 0']
    #allocation3 [shape = 's32[2]{0}', space=sflag, size = 0x8, scoped, tag = 'scoped memory for tpu_custom_call.1']
    #allocation4 [shape = 's32[2]{0}', space=sflag, size = 0x8, scoped, tag = 'scoped memory for tpu_custom_call.1']
    #allocation5 [shape = 'u8[1024]{0}', space=vmem, size = 0x400, scoped, tag = 'output window, operand 0']
    #allocation6 [shape = 'u8[1024]{0}', space=vmem, size = 0x400, scoped, tag = 'output window, operand 1']
    #allocation7 [shape = 's32[2]{0}', space=sflag, size = 0x8, scoped, tag = 'scoped memory for tpu_custom_call.1']
    #allocation8 [shape = 'u8[8192]{0}', space=vmem, size = 0x2000, scoped, tag = 'output window, operand 2']
    %9 = vsyncpa [#allocation3], 0
    %s10 = scalar_lea.sflag [#allocation3], 1
    %11 = vsyncpa %s10, 0
    %12 = vsyncpa [#allocation4], 0
    %s13 = scalar_lea.sflag [#allocation4], 1
    %14 = vsyncpa %s13, 0
    %15 = vsyncpa [#allocation7], 0
    %s16 = scalar_lea.sflag [#allocation7], 1
    %17 = vsyncpa %s16, 0
    loop: start=0, step=1, limit=4
    $region2: #{tpu_custom_call.1} parent=1 // loop_pre_header
      _
    $region3: #{tpu_custom_call.1} parent=1 // loop_header
      %s19 = sphi 0, %s23
      %p20 = scmp.ge.s32.totalorder %s19, 4
      %s29 = sphi 0, %s31
      %s32 = sphi 0, %s29
      %s33 = sphi 0, %s32
      %s49 = sphi 0, %s33
      %s55 = sphi 0, %s57
      %s58 = sphi 0, %s55
      %s59 = sphi 0, %s58
      %s75 = sphi 0, %s59
      %s81 = sphi 0, %s83
      %s84 = sphi 0, %s81
      %s85 = sphi 0, %s84
      %s101 = sphi 0, %s85
      %s107 = sphi 0, %s109
      %s110 = sphi 0, %s107
      %s111 = sphi 0, %s110
      %s127 = sphi 0, %s111
    $region4: #{tpu_custom_call.1} parent=1 // loop_header_branch
      %22 = sbr.rel (%p20) target = $region8
    $region5: #{tpu_custom_call.1} parent=1 // loop_body
      %s24 = ssub.s32 %s19, 1
      %s25 = ssub.s32 %s19, 2
      %s26 = sadd.s32 %s19, 1
      %s27 = ssub.s32 %s19, %s26
      %p28 = scmp.eq.s32.totalorder %s27, 0
      %s30 = sadd.s32 %s29, 1
      %s31 = scalar_select %p28, %s29, %s30
      %p34 = pneg %p28
      %p35 = scmp.eq.s32.totalorder %s19, 1
      %p36 = por %p34, %p35
      %p37 = scmp.ne.s32.totalorder %s29, %s32
      %p38 = scmp.eq.s32.totalorder %s19, 0
      %p39 = por %p37, %p38
      %p40 = scmp.ne.s32.totalorder %s29, %s32
      %p41 = scmp.eq.s32.totalorder %s24, 1
      %p42 = por %p40, %p41
      %p43 = scmp.ne.s32.totalorder %s32, %s33
      %p44 = scmp.eq.s32.totalorder %s24, 0
      %p45 = por %p43, %p44
      %p46 = scmp.ne.s32.totalorder %s32, %s33
      %p47 = scmp.eq.s32.totalorder %s25, 1
      %p48 = por %p46, %p47
      %p50 = scmp.ne.s32.totalorder %s33, %s49
      %p51 = scmp.eq.s32.totalorder %s25, 0
      %p52 = por %p50, %p51
      %s53 = ssub.s32 %s19, %s26
      %p54 = scmp.eq.s32.totalorder %s53, 0
      %s56 = sadd.s32 %s55, 1
      %s57 = scalar_select %p54, %s55, %s56
      %p60 = pneg %p54
      %p61 = scmp.eq.s32.totalorder %s19, 1
      %p62 = por %p60, %p61
      %p63 = scmp.ne.s32.totalorder %s55, %s58
      %p64 = scmp.eq.s32.totalorder %s19, 0
      %p65 = por %p63, %p64
      %p66 = scmp.ne.s32.totalorder %s55, %s58
      %p67 = scmp.eq.s32.totalorder %s24, 1
      %p68 = por %p66, %p67
      %p69 = scmp.ne.s32.totalorder %s58, %s59
      %p70 = scmp.eq.s32.totalorder %s24, 0
      %p71 = por %p69, %p70
      %p72 = scmp.ne.s32.totalorder %s58, %s59
      %p73 = scmp.eq.s32.totalorder %s25, 1
      %p74 = por %p72, %p73
      %p76 = scmp.ne.s32.totalorder %s59, %s75
      %p77 = scmp.eq.s32.totalorder %s25, 0
      %p78 = por %p76, %p77
      %s79 = ssub.s32 %s19, %s26
      %p80 = scmp.eq.s32.totalorder %s79, 0
      %s82 = sadd.s32 %s81, 1
      %s83 = scalar_select %p80, %s81, %s82
      %p86 = pneg %p80
      %p87 = scmp.eq.s32.totalorder %s19, 1
      %p88 = por %p86, %p87
      %p89 = scmp.ne.s32.totalorder %s81, %s84
      %p90 = scmp.eq.s32.totalorder %s19, 0
      %p91 = por %p89, %p90
      %p92 = scmp.ne.s32.totalorder %s81, %s84
      %p93 = scmp.eq.s32.totalorder %s24, 1
      %p94 = por %p92, %p93
      %p95 = scmp.ne.s32.totalorder %s84, %s85
      %p96 = scmp.eq.s32.totalorder %s24, 0
      %p97 = por %p95, %p96
      %p98 = scmp.ne.s32.totalorder %s84, %s85
      %p99 = scmp.eq.s32.totalorder %s25, 1
      %p100 = por %p98, %p99
      %p102 = scmp.ne.s32.totalorder %s85, %s101
      %p103 = scmp.eq.s32.totalorder %s25, 0
      %p104 = por %p102, %p103
      %s105 = ssub.s32 %s19, %s26
      %p106 = scmp.eq.s32.totalorder %s105, 0
      %s108 = sadd.s32 %s107, 1
      %s109 = scalar_select %p106, %s107, %s108
      %p112 = pneg %p106
      %p113 = scmp.eq.s32.totalorder %s19, 1
      %p114 = por %p112, %p113
      %p115 = scmp.ne.s32.totalorder %s107, %s110
      %p116 = scmp.eq.s32.totalorder %s19, 0
      %p117 = por %p115, %p116
      %p118 = scmp.ne.s32.totalorder %s107, %s110
      %p119 = scmp.eq.s32.totalorder %s24, 1
      %p120 = por %p118, %p119
      %p121 = scmp.ne.s32.totalorder %s110, %s111
      %p122 = scmp.eq.s32.totalorder %s24, 0
      %p123 = por %p121, %p122
      %p124 = scmp.ne.s32.totalorder %s110, %s111
      %p125 = scmp.eq.s32.totalorder %s25, 1
      %p126 = por %p124, %p125
      %p128 = scmp.ne.s32.totalorder %s111, %s127
      %p129 = scmp.eq.s32.totalorder %s25, 0
      %p130 = por %p128, %p129
      %p131 = scmp.le.s32.totalorder 1, %s19
      %p132 = scmp.lt.s32.totalorder %s19, 3
      %p133 = pnand %p131, %p132
      %p134 = pneg %p133
      // Predicated region
      $region9: #{tpu_custom_call.1} parent=5 // pred_check
        _
      $region10: #{tpu_custom_call.1} parent=5 // pred_check_branch
        %136 = sbr.rel (%p133) target = $region12
      $region11: #{tpu_custom_call.1} parent=5 // pred_region
        %s137 = ssub.s32 %s19, 1
      $region12: #{tpu_custom_call.1} parent=5 // pred_fallthru
        _
      %p138 = scmp.lt.s32.totalorder %s19, 2
      // Predicated region
      $region13: #{tpu_custom_call.1} parent=5 // pred_check
        %p139 = pneg %p138
      $region14: #{tpu_custom_call.1} parent=5 // pred_check_branch
        %141 = sbr.rel (%p139) target = $region16
      $region15: #{tpu_custom_call.1} parent=5 // pred_region
        // Predicated region
        $region17: #{tpu_custom_call.1} parent=15 // pred_check
          %p142 = pneg %p39
        $region18: #{tpu_custom_call.1} parent=15 // pred_check_branch
          %144 = sbr.rel (%p142) target = $region20
        $region19: #{tpu_custom_call.1} parent=15 // pred_region
          %s145 = sand.u32 %s29, 1
          %s146 = scalar_lea.sflag [#allocation3], %s145
          %s147 = sand.u32 %s29, 1
          %s148 = smul.addr %s147, 8
          %s149 = scalar_lea.vmem [#allocation2], %s148
          %s151 = ssub.s32 128, 128
          %152 = vsyncadd %s146, %s151
          %s153 = smul.addr %s19, 128
          %s154 = scalar_lea.hbm %s0, %s153
          %s156 = sshll.u32 %s149, 4
          %s157 = int_to_ptr.vmem [resolvable:$true] %s156
          %159 = dma.hbm_to_vmem [thread:$0]  %s154, 128, %s157, %s146
        $region20: #{tpu_custom_call.1} parent=15 // pred_fallthru
          _
      $region16: #{tpu_custom_call.1} parent=5 // pred_fallthru
        _
      %p160 = scmp.le.s32.totalorder 1, %s19
      %p161 = scmp.lt.s32.totalorder %s19, 3
      %p162 = pnand %p160, %p161
      %p163 = pneg %p162
      // Predicated region
      $region21: #{tpu_custom_call.1} parent=5 // pred_check
        _
      $region22: #{tpu_custom_call.1} parent=5 // pred_check_branch
        %165 = sbr.rel (%p162) target = $region24
      $region23: #{tpu_custom_call.1} parent=5 // pred_region
        %s166 = ssub.s32 %s19, 1
        %s167 = sand.u32 %s32, 1
        %s168 = scalar_lea.sflag [#allocation3], %s167
        %s169 = sand.u32 %s32, 1
        %s170 = smul.addr %s169, 8
        %s171 = scalar_lea.vmem [#allocation2], %s170
        // Predicated region
        $region25: #{tpu_custom_call.1} parent=23 // pred_check
          %p172 = pneg %p45
        $region26: #{tpu_custom_call.1} parent=23 // pred_check_branch
          %174 = sbr.rel (%p172) target = $region28
        $region27: #{tpu_custom_call.1} parent=23 // pred_region
          %175 = dma.done %s168, 128
        $region28: #{tpu_custom_call.1} parent=23 // pred_fallthru
          _
        %s176 = sand.u32 %s32, 1
        %s177 = scalar_lea.sflag [#allocation3], %s176
        %s178 = sand.u32 %s32, 1
        %s179 = smul.addr %s178, 8
        %s180 = scalar_lea.vmem [#allocation2], %s179
        %p181 = pneg %p45
        %p182 = pneg %p42
        %p183 = pneg %p71
        %p184 = pneg %p68
        %s185 = sand.u32 %s58, 1
        %s186 = scalar_lea.sflag [#allocation4], %s185
        %s187 = sand.u32 %s58, 1
        %s188 = scalar_lea.vmem [#allocation5], %s187
        %p189 = pneg %p97
        %p190 = pneg %p94
        %s191 = sand.u32 %s24, 1
        %s192 = scalar_lea.sflag [#allocation7], %s191
        %s193 = sand.u32 %s84, 1
        %s194 = scalar_lea.vmem [#allocation6], %s193
        %p195 = pneg %p123
        %p196 = pneg %p120
        %s197 = sand.u32 %s24, 1
        %s198 = scalar_lea.sflag [#allocation7], %s197
        %s199 = sand.u32 %s110, 1
        %s200 = smul.addr %s199, 8
        %s201 = scalar_lea.vmem [#allocation8], %s200
        %v202 = vld [vmem:[%s171] sm:$0xff]
        %v203 = vrot.slane %v202, 4
        %v204 = vadd.f32 %v202, %v203
        %v205 = vrot.slane %v204, 2
        %v206 = vadd.f32 %v204, %v205
        %v207 = vrot.slane %v206, 1
        %v208 = vadd.f32 %v206, %v207
        %v209 = vrcp.pop 8.0
        %v210 = vmul.f32 %v208, %v209
        %v211 = vsub.f32 %v202, %v210
        %v212 = vmul.f32 %v211, %v211
        %v213 = vrot.slane %v212, 4
        %v214 = vadd.f32 %v212, %v213
        %v215 = vrot.slane %v214, 2
        %v216 = vadd.f32 %v214, %v215
        %v217 = vrot.slane %v216, 1
        %v218 = vadd.f32 %v216, %v217
        %v219 = vrcp.pop 7.0
        %v220 = vmul.f32 %v218, %v219
        %v221 = vrsqrt.pop %v220
        %v222 = vmul.f32 %v220, %v221
        %vm223 = vcmp.eq.f32.partialorder %v220, inf
        %v224 = vsel %vm223, %v220, %v222
        %vm225 = vcmp.eq.f32.partialorder %v220, 0.0
        %v226 = vand.u32 %v220, 2147483648
        %v227 = vsel %vm225, %v226, %v224
        %v228 = vadd.f32 %v227, 1e-12
        %v229 = vrcp.pop %v228
        %v230 = vmul.f32 1.0, %v229
        %v231 = vlog2.pop %v230
        %v232 = vmul.f32 %v231, 0.6931472
        %233 = vst [vmem:[%s188] sm:$0x1] %v232
        %234 = vst [vmem:[%s194] sm:$0x1] %v210
        %v235 = vmul.f32 %v232, 1.442695
        %v236 = vpow.pop %v235
        %v237 = vmul.f32 %v211, %v236
        %238 = vst [vmem:[%s201] sm:$0xff] %v237
        %s239 = sand.u32 %s58, 1
        %s240 = scalar_lea.sflag [#allocation4], %s239
        %s241 = sand.u32 %s58, 1
        %s242 = scalar_lea.vmem [#allocation5], %s241
        %s243 = sand.u32 %s24, 1
        %s244 = scalar_lea.sflag [#allocation7], %s243
        %s245 = sand.u32 %s84, 1
        %s246 = scalar_lea.vmem [#allocation6], %s245
        %s247 = sand.u32 %s24, 1
        %s248 = scalar_lea.sflag [#allocation7], %s247
        %s249 = sand.u32 %s110, 1
        %s250 = smul.addr %s249, 8
        %s251 = scalar_lea.vmem [#allocation8], %s250
        // Predicated region
        $region29: #{tpu_custom_call.1} parent=23 // pred_check
          %p252 = pneg %p68
        $region30: #{tpu_custom_call.1} parent=23 // pred_check_branch
          %254 = sbr.rel (%p252) target = $region32
        $region31: #{tpu_custom_call.1} parent=23 // pred_region
          %s256 = ssub.s32 16, 16
          %257 = vsyncadd %s240, %s256
          %s258 = smul.addr %s24, 16
          %s259 = scalar_lea.hbm %s1, %s258
          %s261 = sshll.u32 %s242, 4
          %s262 = int_to_ptr.vmem [resolvable:$true] %s261
          %264 = dma.vmem_to_hbm [thread:$0]  %s262, 16, %s259, %s240
        $region32: #{tpu_custom_call.1} parent=23 // pred_fallthru
          _
        // Predicated region
        $region33: #{tpu_custom_call.1} parent=23 // pred_check
          %p265 = pneg %p94
        $region34: #{tpu_custom_call.1} parent=23 // pred_check_branch
          %267 = sbr.rel (%p265) target = $region36
        $region35: #{tpu_custom_call.1} parent=23 // pred_region
          %s269 = ssub.s32 16, 16
          %270 = vsyncadd %s244, %s269
          %s271 = smul.addr %s24, 16
          %s272 = scalar_lea.hbm %s2, %s271
          %s274 = sshll.u32 %s246, 4
          %s275 = int_to_ptr.vmem [resolvable:$true] %s274
          %277 = dma.vmem_to_hbm [thread:$0]  %s275, 16, %s272, %s244
        $region36: #{tpu_custom_call.1} parent=23 // pred_fallthru
          _
        // Predicated region
        $region37: #{tpu_custom_call.1} parent=23 // pred_check
          %p278 = pneg %p120
        $region38: #{tpu_custom_call.1} parent=23 // pred_check_branch
          %280 = sbr.rel (%p278) target = $region40
        $region39: #{tpu_custom_call.1} parent=23 // pred_region
          %s282 = ssub.s32 128, 128
          %283 = vsyncadd %s248, %s282
          %s284 = smul.addr %s24, 128
          %s285 = scalar_lea.hbm %s3, %s284
          %s287 = sshll.u32 %s251, 4
          %s288 = int_to_ptr.vmem [resolvable:$true] %s287
          %290 = dma.vmem_to_hbm [thread:$0]  %s288, 128, %s285, %s248
        $region40: #{tpu_custom_call.1} parent=23 // pred_fallthru
          _
      $region24: #{tpu_custom_call.1} parent=5 // pred_fallthru
        _
      %p291 = scmp.le.s32.totalorder 2, %s19
      // Predicated region
      $region41: #{tpu_custom_call.1} parent=5 // pred_check
        %p292 = pneg %p291
      $region42: #{tpu_custom_call.1} parent=5 // pred_check_branch
        %294 = sbr.rel (%p292) target = $region44
      $region43: #{tpu_custom_call.1} parent=5 // pred_region
        %s295 = ssub.s32 %s19, 2
        // Predicated region
        $region45: #{tpu_custom_call.1} parent=43 // pred_check
          %p296 = pneg %p74
        $region46: #{tpu_custom_call.1} parent=43 // pred_check_branch
          %298 = sbr.rel (%p296) target = $region48
        $region47: #{tpu_custom_call.1} parent=43 // pred_region
          %s299 = sand.u32 %s59, 1
          %s300 = scalar_lea.sflag [#allocation4], %s299
          %s301 = sand.u32 %s59, 1
          %s302 = scalar_lea.vmem [#allocation5], %s301
          %303 = dma.done %s300, 16
        $region48: #{tpu_custom_call.1} parent=43 // pred_fallthru
          _
        // Predicated region
        $region49: #{tpu_custom_call.1} parent=43 // pred_check
          %p304 = pneg %p100
        $region50: #{tpu_custom_call.1} parent=43 // pred_check_branch
          %306 = sbr.rel (%p304) target = $region52
        $region51: #{tpu_custom_call.1} parent=43 // pred_region
          %s307 = sand.u32 %s25, 1
          %s308 = scalar_lea.sflag [#allocation7], %s307
          %s309 = sand.u32 %s85, 1
          %s310 = scalar_lea.vmem [#allocation6], %s309
          %311 = dma.done %s308, 16
        $region52: #{tpu_custom_call.1} parent=43 // pred_fallthru
          _
        // Predicated region
        $region53: #{tpu_custom_call.1} parent=43 // pred_check
          %p312 = pneg %p126
        $region54: #{tpu_custom_call.1} parent=43 // pred_check_branch
          %314 = sbr.rel (%p312) target = $region56
        $region55: #{tpu_custom_call.1} parent=43 // pred_region
          %s315 = sand.u32 %s25, 1
          %s316 = scalar_lea.sflag [#allocation7], %s315
          %s317 = sand.u32 %s111, 1
          %s318 = smul.addr %s317, 8
          %s319 = scalar_lea.vmem [#allocation8], %s318
          %320 = dma.done %s316, 128
        $region56: #{tpu_custom_call.1} parent=43 // pred_fallthru
          _
      $region44: #{tpu_custom_call.1} parent=5 // pred_fallthru
        _
    $region6: #{tpu_custom_call.1} parent=1 // loop_footer
      %s23 = sadd.s32 1, %s19
    $region7: #{tpu_custom_call.1} parent=1 // loop_footer_branch
      %18 = sbr.rel target = $region3
    $region8: #{tpu_custom_call.1} parent=1 // loop_exit
      _
    %321 = vsyncpa [#allocation3], 1
    %s322 = scalar_lea.sflag [#allocation3], 1
    %323 = vsyncpa %s322, 1
    %324 = vsyncpa [#allocation4], 1
    %s325 = scalar_lea.sflag [#allocation4], 1
    %326 = vsyncpa %s325, 1
    %327 = vsyncpa [#allocation7], 1
    %s328 = scalar_lea.sflag [#allocation7], 1
    %329 = vsyncpa %s328, 1

</llo_original>
